<compile_context>
chip_gen: v7x
topology: tpu7x:2x2x1
jax: 0.10.0
libtpu: 0.0.40
codegen_flags: <defaults>
</compile_context>

<pallas_src>
import jax
import jax.numpy as jnp
from jax import lax
from jax.experimental import pallas as pl
from jax.experimental.pallas import tpu as pltpu


# --------------------------------------------------------------------------- #
# Helpers
# --------------------------------------------------------------------------- #
def _round_up(x, m):
    return ((x + m - 1) // m) * m


def _pad2d(x, rows, cols):
    r, c = x.shape
    return jnp.pad(x, ((0, rows - r), (0, cols - c)))


# --------------------------------------------------------------------------- #
# Pallas kernel
# --------------------------------------------------------------------------- #
def _make_compconv_kernel(comp_fn, norm, has_bias, activation, mxu_dtype):
    """Build the kernel body with static config baked in (traced once)."""

    def kernel(adj_ref, feat_ref, w_ref, hw_ref, deg_ref, normv_ref, bias_ref,
               out_ref, acc_ref):
        k = pl.program_id(1)

        @pl.when(k == 0)
        def _init():
            acc_ref[...] = jnp.zeros_like(acc_ref)

        # Aggregation: acc[v, :] += sum_u adj[v, u] * feat[u, :]   (MXU, f32 acc)
        acc_ref[...] += jnp.dot(adj_ref[...], feat_ref[...],
                                preferred_element_type=jnp.float32)

        @pl.when(k == pl.num_programs(1) - 1)
        def _finalize():
            # Projection happens once per dst tile (grid-invariant work removed).
            rst = jnp.dot(acc_ref[...].astype(mxu_dtype), w_ref[...],
                          preferred_element_type=jnp.float32)
            if comp_fn == "sub":
                # per-edge '- h_e' folds to '- deg[v] * (h_e @ W)' after aggregation
                rst = rst - deg_ref[...] * hw_ref[...]
            if norm != "none":
                rst = rst * normv_ref[...]      # precomputed 1/deg or deg^-0.5
            if has_bias:
                rst = rst + bias_ref[...]
            if activation is not None:
                rst = activation(rst)
            out_ref[...] = rst.astype(out_ref.dtype)

    return kernel


# --------------------------------------------------------------------------- #
# Wrapper
# --------------------------------------------------------------------------- #
def comp_conv(adj, feat, h_e, weight, bias=None, *, comp_fn="mul", norm="right",
              activation=None, tile_n=128, tile_k=128, mxu_dtype=jnp.bfloat16):
    """Pallas CompConv forward.

    adj    : (N, N) dense adjacency, adj[v, u] = #edges u -> v
    feat   : (N, Din) node features
    h_e    : (1, Din) relation / edge-type feature
    weight : (Din, Dout)  (the module's `Linear` parameter)
    bias   : (Dout,) or None
    """
    if comp_fn not in ("sub", "mul", "ccorr"):
        raise ValueError("comp_fn must be one of 'sub', 'mul', 'ccorr'")
    if norm not in ("none", "right", "both"):
        raise ValueError("norm must be one of 'none', 'right', 'both'")

    N, Din = feat.shape
    Dout = weight.shape[1]
    assert adj.shape == (N, N)
    # TODO(synk): bipartite graphs (a (feat_src, feat_dst) pair) are not implemented.

    feat32 = feat.astype(jnp.float32)
    w32 = weight.astype(jnp.float32)
    he32 = h_e.astype(jnp.float32).reshape(1, Din)

    # ---- fold the composition into the weight matrix (wrapper glue) -------- #
    if comp_fn == "mul":
        w_eff = he32[0][:, None] * w32                       # (Din, Dout)
    elif comp_fn == "ccorr":
        idx = (jnp.arange(Din)[:, None] + jnp.arange(Din)[None, :]) % Din
        circ = he32[0][idx]                                  # C[j,k] = h_e[(j+k)%Din]
        w_eff = circ @ w32                                   # (Din, Dout)
    else:  # 'sub'
        w_eff = w32
    h_w = he32 @ w32                                         # (1, Dout) sub correction

    # ---- per-dst-node degree and normalization factors (precomputed) ------- #
    deg = jnp.sum(adj.astype(jnp.float32), axis=1, keepdims=True)    # (N, 1)
    degc = jnp.maximum(deg, 1.0)
    if norm == "right":
        normv = 1.0 / degc
    elif norm == "both":
        normv = lax.rsqrt(degc)
    else:
        normv = jnp.ones_like(degc)

    # ---- pad to TPU-friendly shapes (lane-dense, tile-aligned) ------------- #
    din_p = _round_up(Din, 128)
    dout_p = _round_up(Dout, 128)
    n_dst = _round_up(N, tile_n)
    n_src = _round_up(N, tile_k)

    adj_p = _pad2d(adj.astype(jnp.float32), n_dst, n_src).astype(mxu_dtype)
    feat_p = _pad2d(feat32, n_src, din_p).astype(mxu_dtype)
    w_p = _pad2d(w_eff, din_p, dout_p).astype(mxu_dtype)
    hw_p = _pad2d(h_w, 1, dout_p)
    deg_p = _pad2d(deg, n_dst, 1)
    normv_p = _pad2d(normv, n_dst, 1)
    has_bias = bias is not None
    b = bias.astype(jnp.float32) if has_bias else jnp.zeros((Dout,), jnp.float32)
    bias_p = _pad2d(b.reshape(1, Dout), 1, dout_p)

    kernel = _make_compconv_kernel(comp_fn, norm, has_bias, activation, mxu_dtype)
    grid = (n_dst // tile_n, n_src // tile_k)

    out = pl.pallas_call(
        kernel,
        out_shape=jax.ShapeDtypeStruct((n_dst, dout_p), jnp.float32),
        grid=grid,
        in_specs=[
            pl.BlockSpec((tile_n, tile_k), lambda i, k: (i, k)),   # adj tile (dst, src)
            pl.BlockSpec((tile_k, din_p), lambda i, k: (k, 0)),    # src features tile
            pl.BlockSpec((din_p, dout_p), lambda i, k: (0, 0)),    # folded weights
            pl.BlockSpec((1, dout_p), lambda i, k: (0, 0)),        # h_e @ W (for 'sub')
            pl.BlockSpec((tile_n, 1), lambda i, k: (i, 0)),        # in-degrees
            pl.BlockSpec((tile_n, 1), lambda i, k: (i, 0)),        # norm factors
            pl.BlockSpec((1, dout_p), lambda i, k: (0, 0)),        # bias
        ],
        out_specs=pl.BlockSpec((tile_n, dout_p), lambda i, k: (i, 0)),
        scratch_shapes=[pltpu.VMEM((tile_n, din_p), jnp.float32)],
        compiler_params=pltpu.CompilerParams(
            dimension_semantics=("parallel", "arbitrary")),
    )(adj_p, feat_p, w_p, hw_p, deg_p, normv_p, bias_p)

    # TODO(synk): for large sparse graphs, skip all-zero adj blocks via a
    # scalar-prefetched nonzero-block list (PrefetchScalarGridSpec) instead of
    # streaming the dense O(N^2) adjacency.
    return out[:N, :Dout]


# --------------------------------------------------------------------------- #
# Pure-JAX reference (edge-list formulation, mirrors the DGL code path)
# --------------------------------------------------------------------------- #
def comp_conv_ref(src, dst, num_nodes, feat, h_e, weight, bias, *,
                  comp_fn, norm, activation):
    E = src.shape[0]
    Din = feat.shape[1]
    feat = feat.astype(jnp.float32)
    h_e = h_e.astype(jnp.float32)
    weight = weight.astype(jnp.float32)
    ew = jnp.broadcast_to(h_e, (E, Din))                  # edata['_edge_weight']
    fs = feat[src]                                        # u's feature per edge
    if comp_fn == "sub":
        comp = fs - ew
    elif comp_fn == "mul":
        comp = fs * ew
    else:  # ccorr(a, b)[k] = sum_j a[j] * b[(j + k) % D]
        idx = (jnp.arange(Din)[:, None] + jnp.arange(Din)[None, :]) % Din
        comp = fs @ h_e[0][idx]
    m = comp @ weight
    rst = jnp.zeros((num_nodes, weight.shape[1]), jnp.float32).at[dst].add(m)
    deg = jnp.zeros((num_nodes,), jnp.float32).at[dst].add(1.0)
    if norm != "none":
        d = jnp.maximum(deg, 1.0)
        nfac = jnp.power(d, -0.5) if norm == "both" else 1.0 / d
        rst = rst * nfac[:, None]
    if bias is not None:
        rst = rst + bias[None, :]
    if activation is not None:
        rst = activation(rst)
    return rst


# --------------------------------------------------------------------------- #
# Demo / self-check
# --------------------------------------------------------------------------- #
if __name__ == "__main__":
    import numpy as np

    N, DIN, DOUT = 200, 96, 64   # deliberately non-multiples of 128 to exercise padding

    # Deterministic graph: self-loops + ring (i -> i+1) + skip edges (i -> i+3).
    # Every node has in-degree 3 (no 0-in-degree nodes, as the module requires).
    src_l, dst_l = [], []
    for i in range(N):
        for d in (0, 1, 3):
            src_l.append(i)
            dst_l.append((i + d) % N)
    src = jnp.asarray(np.array(src_l, np.int32))
    dst = jnp.asarray(np.array(dst_l, np.int32))

    adj_np = np.zeros((N, N), np.float32)
    for u, v in zip(src_l, dst_l):
        adj_np[v, u] += 1.0                              # adj[dst, src]
    adj = jnp.asarray(adj_np)

    # Deterministic parameters / inputs.
    key = jax.random.PRNGKey(0)
    k_feat, k_he, k_w, k_b = jax.random.split(key, 4)
    feat = jax.random.normal(k_feat, (N, DIN), jnp.float32)
    h_e = jax.random.normal(k_he, (1, DIN), jnp.float32)
    weight = jax.random.normal(k_w, (DIN, DOUT), jnp.float32) / jnp.sqrt(DIN)
    bias = jax.random.normal(k_b, (DOUT,), jnp.float32) * 0.1

    configs = [
        # (comp_fn, norm, activation, use_bias)
        ("sub",   "right", None,        True),
        ("mul",   "right", None,        True),
        ("ccorr", "right", None,        True),
        ("mul",   "both",  jax.nn.relu, True),
        ("sub",   "none",  None,        False),
    ]

    ok = True
    for comp_fn, norm, act, use_bias in configs:
        b = bias if use_bias else None
        out = comp_conv(adj, feat, h_e, weight, b,
                        comp_fn=comp_fn, norm=norm, activation=act)
        out = jax.block_until_ready(out)
        ref = comp_conv_ref(src, dst, N, feat, h_e, weight, b,
                            comp_fn=comp_fn, norm=norm, activation=act)
        err = float(jnp.max(jnp.abs(out - ref)))
        scale = float(jnp.maximum(1.0, jnp.max(jnp.abs(ref))))
        if err > 3e-2 * scale:   # tolerance sized for bf16 MXU inputs / f32 accumulation
            ok = False
            print(f"MISMATCH comp_fn={comp_fn} norm={norm}: "
                  f"max abs err {err:.4e} (ref scale {scale:.3f})")

    if ok:
        print("KERNEL_OK")
</pallas_src>

<mosaic_0001>
module attributes {stable_mosaic.version = 11 : i64} {
  func.func @kernel(%arg0: i32, %arg1: i32, %arg2: memref<128x128xbf16, #tpu.memory_space<vmem>>, %arg3: memref<128x128xbf16, #tpu.memory_space<vmem>>, %arg4: memref<128x128xbf16, #tpu.memory_space<vmem>>, %arg5: memref<1x128xf32, #tpu.memory_space<vmem>>, %arg6: memref<128x1xf32, #tpu.memory_space<vmem>>, %arg7: memref<128x1xf32, #tpu.memory_space<vmem>>, %arg8: memref<1x128xf32, #tpu.memory_space<vmem>>, %arg9: memref<128x128xf32, #tpu.memory_space<vmem>>, %arg10: memref<128x128xf32, #tpu.memory_space<vmem>>) attributes {dimension_semantics = [#tpu.dimension_semantics<parallel>, #tpu.dimension_semantics<arbitrary>], iteration_bounds = array<i64: 2, 2>, scalar_prefetch = 0 : i64, scratch_operands = 1 : i64, tpu.core_type = #tpu.core_type<tc>, window_params = [{transform_indices = @transform_0, window_bounds = array<i64: 128, 128>}, {transform_indices = @transform_1, window_bounds = array<i64: 128, 128>}, {pipeline_mode = #tpu.pipeline_mode<synchronous>, transform_indices = @transform_2, window_bounds = array<i64: 128, 128>}, {pipeline_mode = #tpu.pipeline_mode<synchronous>, transform_indices = @transform_3, window_bounds = array<i64: 1, 128>}, {transform_indices = @transform_4, window_bounds = array<i64: 128, 1>}, {transform_indices = @transform_5, window_bounds = array<i64: 128, 1>}, {pipeline_mode = #tpu.pipeline_mode<synchronous>, transform_indices = @transform_6, window_bounds = array<i64: 1, 128>}, {transform_indices = @transform_7, window_bounds = array<i64: 128, 128>}]} {
    %c0_i32 = arith.constant 0 : i32
    %0 = arith.cmpi eq, %arg1, %c0_i32 : i32
    %1 = arith.extui %0 : i1 to i32
    %c0_i32_0 = arith.constant 0 : i32
    %2 = arith.cmpi ne, %1, %c0_i32_0 : i32
    scf.if %2 {
      %cst_9 = arith.constant 0.000000e+00 : f32
      %12 = vector.broadcast %cst_9 : f32 to vector<128x128xf32>
      %c0_10 = arith.constant 0 : index
      %c0_11 = arith.constant 0 : index
      %13 = vector.load %arg10[%c0_10, %c0_11] : memref<128x128xf32, #tpu.memory_space<vmem>>, vector<128x128xf32>
      tpu.vector_store %arg10[%c0_10, %c0_11], %12 {strides = array<i32>} : memref<128x128xf32, #tpu.memory_space<vmem>>, vector<128x128xf32>,
    } else {
    }
    %c0 = arith.constant 0 : index
    %c0_1 = arith.constant 0 : index
    %3 = vector.load %arg10[%c0, %c0_1] : memref<128x128xf32, #tpu.memory_space<vmem>>, vector<128x128xf32>
    %c0_2 = arith.constant 0 : index
    %c0_3 = arith.constant 0 : index
    %4 = vector.load %arg2[%c0_2, %c0_3] : memref<128x128xbf16, #tpu.memory_space<vmem>>, vector<128x128xbf16>
    %c0_4 = arith.constant 0 : index
    %c0_5 = arith.constant 0 : index
    %5 = vector.load %arg3[%c0_4, %c0_5] : memref<128x128xbf16, #tpu.memory_space<vmem>>, vector<128x128xbf16>
    %cst = arith.constant dense<0.000000e+00> : vector<128x128xf32>
    %6 = tpu.matmul %4, %5, %cst {dimension_numbers = #tpu.dot_dimension_numbers<[1], [0], [0], [1], [0, 0, 1, 1], [], []>} : vector<128x128xbf16>, vector<128x128xbf16>, vector<128x128xf32> -> vector<128x128xf32>
    %7 = arith.addf %3, %6 : vector<128x128xf32>
    %c0_6 = arith.constant 0 : index
    %c0_7 = arith.constant 0 : index
    %8 = vector.load %arg10[%c0_6, %c0_7] : memref<128x128xf32, #tpu.memory_space<vmem>>, vector<128x128xf32>
    tpu.vector_store %arg10[%c0_6, %c0_7], %7 {strides = array<i32>} : memref<128x128xf32, #tpu.memory_space<vmem>>, vector<128x128xf32>,
    %c1_i32 = arith.constant 1 : i32
    %9 = arith.cmpi eq, %arg1, %c1_i32 : i32
    %10 = arith.extui %9 : i1 to i32
    %c0_i32_8 = arith.constant 0 : i32
    %11 = arith.cmpi ne, %10, %c0_i32_8 : i32
    scf.if %11 {
      %c0_9 = arith.constant 0 : index
      %c0_10 = arith.constant 0 : index
      %12 = vector.load %arg10[%c0_9, %c0_10] : memref<128x128xf32, #tpu.memory_space<vmem>>, vector<128x128xf32>
      %13 = arith.truncf %12 : vector<128x128xf32> to vector<128x128xbf16>
      %c0_11 = arith.constant 0 : index
      %c0_12 = arith.constant 0 : index
      %14 = vector.load %arg4[%c0_11, %c0_12] : memref<128x128xbf16, #tpu.memory_space<vmem>>, vector<128x128xbf16>
      %cst_13 = arith.constant dense<0.000000e+00> : vector<128x128xf32>
      %15 = tpu.matmul %13, %14, %cst_13 {dimension_numbers = #tpu.dot_dimension_numbers<[1], [0], [0], [1], [0, 0, 1, 1], [], []>} : vector<128x128xbf16>, vector<128x128xbf16>, vector<128x128xf32> -> vector<128x128xf32>
      %c0_14 = arith.constant 0 : index
      %c0_15 = arith.constant 0 : index
      %16 = vector.load %arg6[%c0_14, %c0_15] : memref<128x1xf32, #tpu.memory_space<vmem>>, vector<128x1xf32>
      %c0_16 = arith.constant 0 : index
      %c0_17 = arith.constant 0 : index
      %17 = vector.load %arg5[%c0_16, %c0_17] : memref<1x128xf32, #tpu.memory_space<vmem>>, vector<1x128xf32>
      %18 = vector.broadcast %16 : vector<128x1xf32> to vector<128x128xf32>
      %19 = vector.broadcast %17 : vector<1x128xf32> to vector<128x128xf32>
      %20 = arith.mulf %18, %19 : vector<128x128xf32>
      %21 = arith.subf %15, %20 : vector<128x128xf32>
      %c0_18 = arith.constant 0 : index
      %c0_19 = arith.constant 0 : index
      %22 = vector.load %arg7[%c0_18, %c0_19] : memref<128x1xf32, #tpu.memory_space<vmem>>, vector<128x1xf32>
      %23 = vector.broadcast %22 : vector<128x1xf32> to vector<128x128xf32>
      %24 = arith.mulf %21, %23 : vector<128x128xf32>
      %c0_20 = arith.constant 0 : index
      %c0_21 = arith.constant 0 : index
      %25 = vector.load %arg8[%c0_20, %c0_21] : memref<1x128xf32, #tpu.memory_space<vmem>>, vector<1x128xf32>
      %26 = vector.broadcast %25 : vector<1x128xf32> to vector<128x128xf32>
      %27 = arith.addf %24, %26 : vector<128x128xf32>
      %c0_22 = arith.constant 0 : index
      %c0_23 = arith.constant 0 : index
      %28 = vector.load %arg9[%c0_22, %c0_23] : memref<128x128xf32, #tpu.memory_space<vmem>>, vector<128x128xf32>
      tpu.vector_store %arg9[%c0_22, %c0_23], %27 {strides = array<i32>} : memref<128x128xf32, #tpu.memory_space<vmem>>, vector<128x128xf32>,
    } else {
    }
    return
  }
  func.func @transform_0(%arg0: i32, %arg1: i32) -> (i32, i32) {
    %c0_i32 = arith.constant 0 : i32
    return %arg0, %arg1 : i32, i32
  }
  func.func @transform_1(%arg0: i32, %arg1: i32) -> (i32, i32) {
    %c0_i32 = arith.constant 0 : i32
    %c0_i32_0 = arith.constant 0 : i32
    return %arg1, %c0_i32 : i32, i32
  }
  func.func @transform_2(%arg0: i32, %arg1: i32) -> (i32, i32) {
    %c0_i32 = arith.constant 0 : i32
    %c0_i32_0 = arith.constant 0 : i32
    %c0_i32_1 = arith.constant 0 : i32
    return %c0_i32, %c0_i32_0 : i32, i32
  }
  func.func @transform_3(%arg0: i32, %arg1: i32) -> (i32, i32) {
    %c0_i32 = arith.constant 0 : i32
    %c0_i32_0 = arith.constant 0 : i32
    %c0_i32_1 = arith.constant 0 : i32
    return %c0_i32, %c0_i32_0 : i32, i32
  }
  func.func @transform_4(%arg0: i32, %arg1: i32) -> (i32, i32) {
    %c0_i32 = arith.constant 0 : i32
    %c0_i32_0 = arith.constant 0 : i32
    return %arg0, %c0_i32 : i32, i32
  }
  func.func @transform_5(%arg0: i32, %arg1: i32) -> (i32, i32) {
    %c0_i32 = arith.constant 0 : i32
    %c0_i32_0 = arith.constant 0 : i32
    return %arg0, %c0_i32 : i32, i32
  }
  func.func @transform_6(%arg0: i32, %arg1: i32) -> (i32, i32) {
    %c0_i32 = arith.constant 0 : i32
    %c0_i32_0 = arith.constant 0 : i32
    %c0_i32_1 = arith.constant 0 : i32
    return %c0_i32, %c0_i32_0 : i32, i32
  }
  func.func @transform_7(%arg0: i32, %arg1: i32) -> (i32, i32) {
    %c0_i32 = arith.constant 0 : i32
    %c0_i32_0 = arith.constant 0 : i32
    return %arg0, %c0_i32 : i32, i32
  }
}

</mosaic_0001>

<llo_original>
// kernel: tpu_custom_call.1
$region0: #{tpu_custom_call.1}
  #allocation0 [shape = 'u32[]', space=smem, size = 0x4, offset = 0x4, fixed_abs, tag = 'smem constant byte address 0x4 - core index']
  #allocation1 [shape = 'u32[144,128]{1,0:T(1,128)}', space=vmem, size = 0x12000, scoped, tag = 'internal scratch']
  #allocation2 [shape = 'f32[128,128]{1,0:T(8,128)}', space=vmem, size = 0x10000, scoped, tag = 'scratch operand']
  %s0 = inlined_call_operand.vmem [shape: bf16[256,256], index: 0, kind: input, shape index: {}]
  %s1 = inlined_call_operand.vmem [shape: bf16[256,128], index: 1, kind: input, shape index: {}]
  %s2 = inlined_call_operand.vmem [shape: bf16[128,128], index: 2, kind: input, shape index: {}]
  %s3 = inlined_call_operand.vmem [shape: f32[1,128], index: 3, kind: input, shape index: {}]
  %s4 = inlined_call_operand.vmem [shape: f32[256,1], index: 4, kind: input, shape index: {}]
  %s5 = inlined_call_operand.vmem [shape: f32[256,1], index: 5, kind: input, shape index: {}]
  %s6 = inlined_call_operand.vmem [shape: f32[1,128], index: 6, kind: input, shape index: {}]
  %s7 = inlined_call_operand.hbm [shape: f32[256,128], index: 7, kind: output, shape index: {}]
  %s8 = sld [smem:[#allocation0]]
  $region110: #{tpu_custom_call.1} parent=0
    _
  %s10 = ssub.s32 1, %s8
  %s11 = scalar_select 0, %s10, %s8
  $region1: #{tpu_custom_call.1} parent=0
    #allocation3 [shape = 'u8[65536]{0}', space=vmem, size = 0x10000, scoped, tag = 'input window, operand 0']
    #allocation4 [shape = 'u8[131072]{0}', space=vmem, size = 0x20000, scoped, tag = 'output window, operand 0']
    #allocation5 [shape = 's32[2]{0}', space=sflag, size = 0x8, scoped, tag = 'scoped memory for tpu_custom_call.1']
    %12 = vsyncpa [#allocation5], 0
    %s13 = scalar_lea.sflag [#allocation5], 1
    %14 = vsyncpa %s13, 0
    loop: start=0, step=1, limit=6
    $region2: #{tpu_custom_call.1} parent=1 // loop_pre_header
      _
    $region3: #{tpu_custom_call.1} parent=1 // loop_header
      %s16 = sphi 0, %s20
      %p17 = scmp.ge.s32.totalorder %s16, 6
      %s23 = sphi 0, %s35
      %s24 = sphi 0, %s31
      %s25 = sphi 0, %s23
      %s26 = sphi 0, %s24
      %s27 = sphi 0, %s25
      %s28 = sphi 0, %s26
      %s40 = sphi 0, %s42
      %s43 = sphi 0, %s40
      %s44 = sphi 0, %s43
      %s60 = sphi 0, %s44
      %s66 = sphi 0, %s68
      %s69 = sphi 0, %s66
      %s70 = sphi 0, %s69
      %s86 = sphi 0, %s70
      %s90 = sphi 0, %s90
      %s92 = sphi 0, %s90
      %s93 = sphi 0, %s92
      %s107 = sphi 0, %s93
      %s111 = sphi 0, %s111
      %s113 = sphi 0, %s111
      %s114 = sphi 0, %s113
      %s128 = sphi 0, %s114
      %s134 = sphi 0, %s136
      %s137 = sphi 0, %s134
      %s138 = sphi 0, %s137
      %s154 = sphi 0, %s138
      %s160 = sphi 0, %s162
      %s163 = sphi 0, %s160
      %s164 = sphi 0, %s163
      %s180 = sphi 0, %s164
      %s184 = sphi 0, %s184
      %s186 = sphi 0, %s184
      %s187 = sphi 0, %s186
      %s201 = sphi 0, %s187
      %s207 = sphi 0, %s209
      %s210 = sphi 0, %s207
      %s211 = sphi 0, %s210
      %s227 = sphi 0, %s211
    $region4: #{tpu_custom_call.1} parent=1 // loop_header_branch
      %19 = sbr.rel (%p17) target = $region8
    $region5: #{tpu_custom_call.1} parent=1 // loop_body
      %s21 = ssub.s32 %s16, 1
      %s22 = ssub.s32 %s16, 2
      %s29 = sadd.s32 1, %s24
      %p30 = scmp.ge.s32.totalorder %s29, 2
      %s31 = scalar_select %p30, 0, %s29
      %s32 = sadd.s32 1, %s23
      %s33 = scalar_select %p30, %s32, %s23
      %p34 = scmp.ge.s32.totalorder %s33, 2
      %s35 = scalar_select %p34, 0, %s33
      %s36 = ssub.s32 %s23, %s35
      %s37 = ssub.s32 %s24, %s31
      %s38 = sor.u32 %s36, %s37
      %p39 = scmp.eq.s32.totalorder %s38, 0
      %s41 = sadd.s32 %s40, 1
      %s42 = scalar_select %p39, %s40, %s41
      %p45 = pneg %p39
      %p46 = scmp.eq.s32.totalorder %s16, 3
      %p47 = por %p45, %p46
      %p48 = scmp.ne.s32.totalorder %s40, %s43
      %p49 = scmp.eq.s32.totalorder %s16, 0
      %p50 = por %p48, %p49
      %p51 = scmp.ne.s32.totalorder %s40, %s43
      %p52 = scmp.eq.s32.totalorder %s21, 3
      %p53 = por %p51, %p52
      %p54 = scmp.ne.s32.totalorder %s43, %s44
      %p55 = scmp.eq.s32.totalorder %s21, 0
      %p56 = por %p54, %p55
      %p57 = scmp.ne.s32.totalorder %s43, %s44
      %p58 = scmp.eq.s32.totalorder %s22, 3
      %p59 = por %p57, %p58
      %p61 = scmp.ne.s32.totalorder %s44, %s60
      %p62 = scmp.eq.s32.totalorder %s22, 0
      %p63 = por %p61, %p62
      %s64 = ssub.s32 %s24, %s31
      %p65 = scmp.eq.s32.totalorder %s64, 0
      %s67 = sadd.s32 %s66, 1
      %s68 = scalar_select %p65, %s66, %s67
      %p71 = pneg %p65
      %p72 = scmp.eq.s32.totalorder %s16, 3
      %p73 = por %p71, %p72
      %p74 = scmp.ne.s32.totalorder %s66, %s69
      %p75 = scmp.eq.s32.totalorder %s16, 0
      %p76 = por %p74, %p75
      %p77 = scmp.ne.s32.totalorder %s66, %s69
      %p78 = scmp.eq.s32.totalorder %s21, 3
      %p79 = por %p77, %p78
      %p80 = scmp.ne.s32.totalorder %s69, %s70
      %p81 = scmp.eq.s32.totalorder %s21, 0
      %p82 = por %p80, %p81
      %p83 = scmp.ne.s32.totalorder %s69, %s70
      %p84 = scmp.eq.s32.totalorder %s22, 3
      %p85 = por %p83, %p84
      %p87 = scmp.ne.s32.totalorder %s70, %s86
      %p88 = scmp.eq.s32.totalorder %s22, 0
      %p89 = por %p87, %p88
      %s91 = sadd.s32 %s90, 1
      %p94 = scmp.eq.s32.totalorder %s16, 3
      %p95 = scmp.ne.s32.totalorder %s90, %s92
      %p96 = scmp.eq.s32.totalorder %s16, 0
      %p97 = por %p95, %p96
      %p98 = scmp.ne.s32.totalorder %s90, %s92
      %p99 = scmp.eq.s32.totalorder %s21, 3
      %p100 = por %p98, %p99
      %p101 = scmp.ne.s32.totalorder %s92, %s93
      %p102 = scmp.eq.s32.totalorder %s21, 0
      %p103 = por %p101, %p102
      %p104 = scmp.ne.s32.totalorder %s92, %s93
      %p105 = scmp.eq.s32.totalorder %s22, 3
      %p106 = por %p104, %p105
      %p108 = scmp.ne.s32.totalorder %s93, %s107
      %p109 = scmp.eq.s32.totalorder %s22, 0
      %p110 = por %p108, %p109
      %s112 = sadd.s32 %s111, 1
      %p115 = scmp.eq.s32.totalorder %s16, 3
      %p116 = scmp.ne.s32.totalorder %s111, %s113
      %p117 = scmp.eq.s32.totalorder %s16, 0
      %p118 = por %p116, %p117
      %p119 = scmp.ne.s32.totalorder %s111, %s113
      %p120 = scmp.eq.s32.totalorder %s21, 3
      %p121 = por %p119, %p120
      %p122 = scmp.ne.s32.totalorder %s113, %s114
      %p123 = scmp.eq.s32.totalorder %s21, 0
      %p124 = por %p122, %p123
      %p125 = scmp.ne.s32.totalorder %s113, %s114
      %p126 = scmp.eq.s32.totalorder %s22, 3
      %p127 = por %p125, %p126
      %p129 = scmp.ne.s32.totalorder %s114, %s128
      %p130 = scmp.eq.s32.totalorder %s22, 0
      %p131 = por %p129, %p130
      %s132 = ssub.s32 %s23, %s35
      %p133 = scmp.eq.s32.totalorder %s132, 0
      %s135 = sadd.s32 %s134, 1
      %s136 = scalar_select %p133, %s134, %s135
      %p139 = pneg %p133
      %p140 = scmp.eq.s32.totalorder %s16, 3
      %p141 = por %p139, %p140
      %p142 = scmp.ne.s32.totalorder %s134, %s137
      %p143 = scmp.eq.s32.totalorder %s16, 0
      %p144 = por %p142, %p143
      %p145 = scmp.ne.s32.totalorder %s134, %s137
      %p146 = scmp.eq.s32.totalorder %s21, 3
      %p147 = por %p145, %p146
      %p148 = scmp.ne.s32.totalorder %s137, %s138
      %p149 = scmp.eq.s32.totalorder %s21, 0
      %p150 = por %p148, %p149
      %p151 = scmp.ne.s32.totalorder %s137, %s138
      %p152 = scmp.eq.s32.totalorder %s22, 3
      %p153 = por %p151, %p152
      %p155 = scmp.ne.s32.totalorder %s138, %s154
      %p156 = scmp.eq.s32.totalorder %s22, 0
      %p157 = por %p155, %p156
      %s158 = ssub.s32 %s23, %s35
      %p159 = scmp.eq.s32.totalorder %s158, 0
      %s161 = sadd.s32 %s160, 1
      %s162 = scalar_select %p159, %s160, %s161
      %p165 = pneg %p159
      %p166 = scmp.eq.s32.totalorder %s16, 3
      %p167 = por %p165, %p166
      %p168 = scmp.ne.s32.totalorder %s160, %s163
      %p169 = scmp.eq.s32.totalorder %s16, 0
      %p170 = por %p168, %p169
      %p171 = scmp.ne.s32.totalorder %s160, %s163
      %p172 = scmp.eq.s32.totalorder %s21, 3
      %p173 = por %p171, %p172
      %p174 = scmp.ne.s32.totalorder %s163, %s164
      %p175 = scmp.eq.s32.totalorder %s21, 0
      %p176 = por %p174, %p175
      %p177 = scmp.ne.s32.totalorder %s163, %s164
      %p178 = scmp.eq.s32.totalorder %s22, 3
      %p179 = por %p177, %p178
      %p181 = scmp.ne.s32.totalorder %s164, %s180
      %p182 = scmp.eq.s32.totalorder %s22, 0
      %p183 = por %p181, %p182
      %s185 = sadd.s32 %s184, 1
      %p188 = scmp.eq.s32.totalorder %s16, 3
      %p189 = scmp.ne.s32.totalorder %s184, %s186
      %p190 = scmp.eq.s32.totalorder %s16, 0
      %p191 = por %p189, %p190
      %p192 = scmp.ne.s32.totalorder %s184, %s186
      %p193 = scmp.eq.s32.totalorder %s21, 3
      %p194 = por %p192, %p193
      %p195 = scmp.ne.s32.totalorder %s186, %s187
      %p196 = scmp.eq.s32.totalorder %s21, 0
      %p197 = por %p195, %p196
      %p198 = scmp.ne.s32.totalorder %s186, %s187
      %p199 = scmp.eq.s32.totalorder %s22, 3
      %p200 = por %p198, %p199
      %p202 = scmp.ne.s32.totalorder %s187, %s201
      %p203 = scmp.eq.s32.totalorder %s22, 0
      %p204 = por %p202, %p203
      %s205 = ssub.s32 %s23, %s35
      %p206 = scmp.eq.s32.totalorder %s205, 0
      %s208 = sadd.s32 %s207, 1
      %s209 = scalar_select %p206, %s207, %s208
      %p212 = pneg %p206
      %p213 = scmp.eq.s32.totalorder %s16, 3
      %p214 = por %p212, %p213
      %p215 = scmp.ne.s32.totalorder %s207, %s210
      %p216 = scmp.eq.s32.totalorder %s16, 0
      %p217 = por %p215, %p216
      %p218 = scmp.ne.s32.totalorder %s207, %s210
      %p219 = scmp.eq.s32.totalorder %s21, 3
      %p220 = por %p218, %p219
      %p221 = scmp.ne.s32.totalorder %s210, %s211
      %p222 = scmp.eq.s32.totalorder %s21, 0
      %p223 = por %p221, %p222
      %p224 = scmp.ne.s32.totalorder %s210, %s211
      %p225 = scmp.eq.s32.totalorder %s22, 3
      %p226 = por %p224, %p225
      %p228 = scmp.ne.s32.totalorder %s211, %s227
      %p229 = scmp.eq.s32.totalorder %s22, 0
      %p230 = por %p228, %p229
      %p231 = scmp.le.s32.totalorder 1, %s16
      %p232 = scmp.lt.s32.totalorder %s16, 5
      %p233 = pnand %p231, %p232
      %p234 = pneg %p233
      // Predicated region
      $region9: #{tpu_custom_call.1} parent=5 // pred_check
        _
      $region10: #{tpu_custom_call.1} parent=5 // pred_check_branch
        %236 = sbr.rel (%p233) target = $region12
      $region11: #{tpu_custom_call.1} parent=5 // pred_region
        %s237 = ssub.s32 %s16, 1
        // Predicated region
        $region13: #{tpu_custom_call.1} parent=11 // pred_check
          %p238 = pneg %p103
        $region14: #{tpu_custom_call.1} parent=11 // pred_check_branch
          %240 = sbr.rel (%p238) target = $region16
        $region15: #{tpu_custom_call.1} parent=11 // pred_region
          _
        $region16: #{tpu_custom_call.1} parent=11 // pred_fallthru
          _
        // Predicated region
        $region17: #{tpu_custom_call.1} parent=11 // pred_check
          %p241 = pneg %p124
        $region18: #{tpu_custom_call.1} parent=11 // pred_check_branch
          %243 = sbr.rel (%p241) target = $region20
        $region19: #{tpu_custom_call.1} parent=11 // pred_region
          _
        $region20: #{tpu_custom_call.1} parent=11 // pred_fallthru
          _
        // Predicated region
        $region21: #{tpu_custom_call.1} parent=11 // pred_check
          %p244 = pneg %p197
        $region22: #{tpu_custom_call.1} parent=11 // pred_check_branch
          %246 = sbr.rel (%p244) target = $region24
        $region23: #{tpu_custom_call.1} parent=11 // pred_region
          _
        $region24: #{tpu_custom_call.1} parent=11 // pred_fallthru
          _
      $region12: #{tpu_custom_call.1} parent=5 // pred_fallthru
        _
      %p247 = scmp.lt.s32.totalorder %s16, 4
      // Predicated region
      $region25: #{tpu_custom_call.1} parent=5 // pred_check
        %p248 = pneg %p247
      $region26: #{tpu_custom_call.1} parent=5 // pred_check_branch
        %250 = sbr.rel (%p248) target = $region28
      $region27: #{tpu_custom_call.1} parent=5 // pred_region
        // Predicated region
        $region29: #{tpu_custom_call.1} parent=27 // pred_check
          %p251 = pneg %p50
        $region30: #{tpu_custom_call.1} parent=27 // pred_check_branch
          %253 = sbr.rel (%p251) target = $region32
        $region31: #{tpu_custom_call.1} parent=27 // pred_region
          %s254 = sand.u32 %s40, 1
          %s255 = sand.u32 %s40, 1
          %s256 = smul.addr %s255, 64
          %s257 = scalar_lea.vmem [#allocation3], %s256
          %s258 = smul.u32 16, %s23
          %s259 = smul.addr %s258, 2
          %s260 = sadd.s32 %s24, %s259
          %s261 = smul.addr %s260, 4
          %s262 = scalar_lea.vmem %s0, %s261
          // Predicated region
          $region33: #{tpu_custom_call.1} parent=31 // pred_check
            _
          $region34: #{tpu_custom_call.1} parent=31 // pred_check_branch
            %264 = sbr.rel (0) target = $region36
          $region35: #{tpu_custom_call.1} parent=31 // pred_region
            // Predicated region
            $region37: #{tpu_custom_call.1} parent=35 // pred_check
              _
            $region38: #{tpu_custom_call.1} parent=35 // pred_check_branch
              %266 = sbr.rel target = $region40
            $region39: #{tpu_custom_call.1} parent=35 // pred_region
              // Predicated region
              $region52: #{tpu_custom_call.1} parent=39 // pred_check
                _
              $region53: #{tpu_custom_call.1} parent=39 // pred_check_branch
                %311 = sbr.rel (0) target = $region55
              $region54: #{tpu_custom_call.1} parent=39 // pred_region
                loop: start=0, step=1, limit=1
                $region56: #{tpu_custom_call.1} parent=54 // loop_pre_header
                  _
                $region57: #{tpu_custom_call.1} parent=54 // loop_header
                  %s313 = sphi 0, %s317
                  %p314 = scmp.ge.s32.totalorder %s313, 1
                  %s318 = sphi %s262, %s262
                  %s319 = sphi %s257, %s257
                $region58: #{tpu_custom_call.1} parent=54 // loop_header_branch
                  %316 = sbr.rel (%p314) target = $region62
                $region59: #{tpu_custom_call.1} parent=54 // loop_body
                  _
                $region60: #{tpu_custom_call.1} parent=54 // loop_footer
                  %s317 = sadd.s32 1, %s313
                $region61: #{tpu_custom_call.1} parent=54 // loop_footer_branch
                  %312 = sbr.rel target = $region57
                $region62: #{tpu_custom_call.1} parent=54 // loop_exit
                  _
                loop: start=0, step=1, limit=1
                $region63: #{tpu_custom_call.1} parent=54 // loop_pre_header
                  _
                $region64: #{tpu_custom_call.1} parent=54 // loop_header
                  %s322 = sphi 0, %s326
                  %p323 = scmp.ge.s32.totalorder %s322, 1
                  %s327 = sphi %s262, %s262
                  %s328 = sphi %s257, %s257
                $region65: #{tpu_custom_call.1} parent=54 // loop_header_branch
                  %325 = sbr.rel (%p323) target = $region69
                $region66: #{tpu_custom_call.1} parent=54 // loop_body
                  %v329 = vld [vmem:[%s327] sm:$0xf]
                  %330 = vst [vmem:[%s328] sm:$0xf] %v329
                  %v331 = vld [vmem:[%s327 + $0x8] sm:$0xf]
                  %332 = vst [vmem:[%s328 + $0x4] sm:$0xf] %v331
                  %v333 = vld [vmem:[%s327 + $0x10] sm:$0xf]
                  %334 = vst [vmem:[%s328 + $0x8] sm:$0xf] %v333
                  %v335 = vld [vmem:[%s327 + $0x18] sm:$0xf]
                  %336 = vst [vmem:[%s328 + $0xc] sm:$0xf] %v335
                  %v337 = vld [vmem:[%s327 + $0x20] sm:$0xf]
                  %338 = vst [vmem:[%s328 + $0x10] sm:$0xf] %v337
                  %v339 = vld [vmem:[%s327 + $0x28] sm:$0xf]
                  %340 = vst [vmem:[%s328 + $0x14] sm:$0xf] %v339
                  %v341 = vld [vmem:[%s327 + $0x30] sm:$0xf]
                  %342 = vst [vmem:[%s328 + $0x18] sm:$0xf] %v341
                  %v343 = vld [vmem:[%s327 + $0x38] sm:$0xf]
                  %344 = vst [vmem:[%s328 + $0x1c] sm:$0xf] %v343
                  %v345 = vld [vmem:[%s327 + $0x40] sm:$0xf]
                  %346 = vst [vmem:[%s328 + $0x20] sm:$0xf] %v345
                  %v347 = vld [vmem:[%s327 + $0x48] sm:$0xf]
                  %348 = vst [vmem:[%s328 + $0x24] sm:$0xf] %v347
                  %v349 = vld [vmem:[%s327 + $0x50] sm:$0xf]
                  %350 = vst [vmem:[%s328 + $0x28] sm:$0xf] %v349
                  %v351 = vld [vmem:[%s327 + $0x58] sm:$0xf]
                  %352 = vst [vmem:[%s328 + $0x2c] sm:$0xf] %v351
                  %v353 = vld [vmem:[%s327 + $0x60] sm:$0xf]
                  %354 = vst [vmem:[%s328 + $0x30] sm:$0xf] %v353
                  %v355 = vld [vmem:[%s327 + $0x68] sm:$0xf]
                  %356 = vst [vmem:[%s328 + $0x34] sm:$0xf] %v355
                  %v357 = vld [vmem:[%s327 + $0x70] sm:$0xf]
                  %358 = vst [vmem:[%s328 + $0x38] sm:$0xf] %v357
                  %v359 = vld [vmem:[%s327 + $0x78] sm:$0xf]
                  %360 = vst [vmem:[%s328 + $0x3c] sm:$0xf] %v359
                $region67: #{tpu_custom_call.1} parent=54 // loop_footer
                  %s326 = sadd.s32 1, %s322
                $region68: #{tpu_custom_call.1} parent=54 // loop_footer_branch
                  %321 = sbr.rel target = $region64
                $region69: #{tpu_custom_call.1} parent=54 // loop_exit
                  _
              $region55: #{tpu_custom_call.1} parent=39 // pred_fallthru
                _
            $region40: #{tpu_custom_call.1} parent=35 // pred_fallthru
              _
            // Predicated region
            $region41: #{tpu_custom_call.1} parent=35 // pred_check
              _
            $region42: #{tpu_custom_call.1} parent=35 // pred_check_branch
              %268 = sbr.rel (0) target = $region44
            $region43: #{tpu_custom_call.1} parent=35 // pred_region
              loop: start=0, step=1, limit=1
              $region45: #{tpu_custom_call.1} parent=43 // loop_pre_header
                _
              $region46: #{tpu_custom_call.1} parent=43 // loop_header
                %s271 = sphi 0, %s275
                %p272 = scmp.ge.s32.totalorder %s271, 1
                %s276 = sphi %s262, %s262
                %s277 = sphi %s257, %s257
              $region47: #{tpu_custom_call.1} parent=43 // loop_header_branch
                %274 = sbr.rel (%p272) target = $region51
              $region48: #{tpu_custom_call.1} parent=43 // loop_body
                %v278 = vld [vmem:[%s276] sm:$0xf]
                %279 = vst [vmem:[%s277] sm:$0xf] %v278
                %v280 = vld [vmem:[%s276 + $0x8] sm:$0xf]
                %281 = vst [vmem:[%s277 + $0x4] sm:$0xf] %v280
                %v282 = vld [vmem:[%s276 + $0x10] sm:$0xf]
                %283 = vst [vmem:[%s277 + $0x8] sm:$0xf] %v282
                %v284 = vld [vmem:[%s276 + $0x18] sm:$0xf]
                %285 = vst [vmem:[%s277 + $0xc] sm:$0xf] %v284
                %v286 = vld [vmem:[%s276 + $0x20] sm:$0xf]
                %287 = vst [vmem:[%s277 + $0x10] sm:$0xf] %v286
                %v288 = vld [vmem:[%s276 + $0x28] sm:$0xf]
                %289 = vst [vmem:[%s277 + $0x14] sm:$0xf] %v288
                %v290 = vld [vmem:[%s276 + $0x30] sm:$0xf]
                %291 = vst [vmem:[%s277 + $0x18] sm:$0xf] %v290
                %v292 = vld [vmem:[%s276 + $0x38] sm:$0xf]
                %293 = vst [vmem:[%s277 + $0x1c] sm:$0xf] %v292
                %v294 = vld [vmem:[%s276 + $0x40] sm:$0xf]
                %295 = vst [vmem:[%s277 + $0x20] sm:$0xf] %v294
                %v296 = vld [vmem:[%s276 + $0x48] sm:$0xf]
                %297 = vst [vmem:[%s277 + $0x24] sm:$0xf] %v296
                %v298 = vld [vmem:[%s276 + $0x50] sm:$0xf]
                %299 = vst [vmem:[%s277 + $0x28] sm:$0xf] %v298
                %v300 = vld [vmem:[%s276 + $0x58] sm:$0xf]
                %301 = vst [vmem:[%s277 + $0x2c] sm:$0xf] %v300
                %v302 = vld [vmem:[%s276 + $0x60] sm:$0xf]
                %303 = vst [vmem:[%s277 + $0x30] sm:$0xf] %v302
                %v304 = vld [vmem:[%s276 + $0x68] sm:$0xf]
                %305 = vst [vmem:[%s277 + $0x34] sm:$0xf] %v304
                %v306 = vld [vmem:[%s276 + $0x70] sm:$0xf]
                %307 = vst [vmem:[%s277 + $0x38] sm:$0xf] %v306
                %v308 = vld [vmem:[%s276 + $0x78] sm:$0xf]
                %309 = vst [vmem:[%s277 + $0x3c] sm:$0xf] %v308
              $region49: #{tpu_custom_call.1} parent=43 // loop_footer
                %s275 = sadd.s32 1, %s271
              $region50: #{tpu_custom_call.1} parent=43 // loop_footer_branch
                %270 = sbr.rel target = $region46
              $region51: #{tpu_custom_call.1} parent=43 // loop_exit
                _
            $region44: #{tpu_custom_call.1} parent=35 // pred_fallthru
              _
          $region36: #{tpu_custom_call.1} parent=31 // pred_fallthru
            _
          %361 = vnop
        $region32: #{tpu_custom_call.1} parent=27 // pred_fallthru
          _
        // Predicated region
        $region70: #{tpu_custom_call.1} parent=27 // pred_check
          %p362 = pneg %p76
        $region71: #{tpu_custom_call.1} parent=27 // pred_check_branch
          %364 = sbr.rel (%p362) target = $region73
        $region72: #{tpu_custom_call.1} parent=27 // pred_region
          %s365 = smul.u32 16, %s24
          %p366 = scmp.lt.s32.totalorder %s365, 31
          %s367 = scalar_select %p366, %s365, 31
          %s368 = smul.addr %s367, 4
          %s369 = scalar_lea.vmem %s1, %s368
          %s370 = smul.u32 16, %s24
        $region73: #{tpu_custom_call.1} parent=27 // pred_fallthru
          _
        // Predicated region
        $region74: #{tpu_custom_call.1} parent=27 // pred_check
          %p371 = pneg %p144
        $region75: #{tpu_custom_call.1} parent=27 // pred_check_branch
          %373 = sbr.rel (%p371) target = $region77
        $region76: #{tpu_custom_call.1} parent=27 // pred_region
          %s374 = smul.u32 16, %s23
          %p375 = scmp.lt.s32.totalorder %s374, 31
          %s376 = scalar_select %p375, %s374, 31
          %s377 = smul.addr %s376, 8
          %s378 = scalar_lea.vmem %s4, %s377
          %s379 = smul.u32 16, %s23
        $region77: #{tpu_custom_call.1} parent=27 // pred_fallthru
          _
        // Predicated region
        $region78: #{tpu_custom_call.1} parent=27 // pred_check
          %p380 = pneg %p170
        $region79: #{tpu_custom_call.1} parent=27 // pred_check_branch
          %382 = sbr.rel (%p380) target = $region81
        $region80: #{tpu_custom_call.1} parent=27 // pred_region
          %s383 = smul.u32 16, %s23
          %p384 = scmp.lt.s32.totalorder %s383, 31
          %s385 = scalar_select %p384, %s383, 31
          %s386 = smul.addr %s385, 8
          %s387 = scalar_lea.vmem %s5, %s386
          %s388 = smul.u32 16, %s23
        $region81: #{tpu_custom_call.1} parent=27 // pred_fallthru
          _
      $region28: #{tpu_custom_call.1} parent=5 // pred_fallthru
        _
      %p389 = scmp.le.s32.totalorder 1, %s16
      %p390 = scmp.lt.s32.totalorder %s16, 5
      %p391 = pnand %p389, %p390
      %p392 = pneg %p391
      // Predicated region
      $region82: #{tpu_custom_call.1} parent=5 // pred_check
        _
      $region83: #{tpu_custom_call.1} parent=5 // pred_check_branch
        %394 = sbr.rel (%p391) target = $region85
      $region84: #{tpu_custom_call.1} parent=5 // pred_region
        %s395 = ssub.s32 %s16, 1
        %s396 = sand.u32 %s43, 1
        %s397 = sand.u32 %s43, 1
        %s398 = smul.addr %s397, 64
        %s399 = scalar_lea.vmem [#allocation3], %s398
        // Predicated region
        $region86: #{tpu_custom_call.1} parent=84 // pred_check
          %p400 = pneg %p56
        $region87: #{tpu_custom_call.1} parent=84 // pred_check_branch
          %402 = sbr.rel (%p400) target = $region89
        $region88: #{tpu_custom_call.1} parent=84 // pred_region
          _
        $region89: #{tpu_custom_call.1} parent=84 // pred_fallthru
          _
        %s403 = sand.u32 %s43, 1
        %s404 = sand.u32 %s43, 1
        %s405 = smul.addr %s404, 64
        %s406 = scalar_lea.vmem [#allocation3], %s405
        %p407 = pneg %p56
        %p408 = pneg %p53
        %s409 = smul.u32 16, %s26
        %p410 = scmp.lt.s32.totalorder %s409, 31
        %s411 = scalar_select %p410, %s409, 31
        %s412 = smul.addr %s411, 4
        %s413 = scalar_lea.vmem %s1, %s412
        %p414 = pneg %p82
        %p415 = pneg %p79
        %p416 = pneg %p103
        %p417 = pneg %p100
        %p418 = pneg %p124
        %p419 = pneg %p121
        %s420 = smul.u32 16, %s25
        %p421 = scmp.lt.s32.totalorder %s420, 31
        %s422 = scalar_select %p421, %s420, 31
        %s423 = smul.addr %s422, 8
        %s424 = scalar_lea.vmem %s4, %s423
        %p425 = pneg %p150
        %p426 = pneg %p147
        %s427 = smul.u32 16, %s25
        %p428 = scmp.lt.s32.totalorder %s427, 31
        %s429 = scalar_select %p428, %s427, 31
        %s430 = smul.addr %s429, 8
        %s431 = scalar_lea.vmem %s5, %s430
        %p432 = pneg %p176
        %p433 = pneg %p173
        %p434 = pneg %p197
        %p435 = pneg %p194
        %p436 = pneg %p223
        %p437 = pneg %p220
        %s438 = sand.u32 %s210, 1
        %s439 = scalar_lea.sflag [#allocation5], %s438
        %s440 = sand.u32 %s210, 1
        %s441 = smul.addr %s440, 128
        %s442 = scalar_lea.vmem [#allocation4], %s441
        %s443 = smul.u32 16, %s25
        %s444 = smul.u32 16, %s26
        %p445 = scmp.lt.s32.totalorder %s444, 31
        %s446 = scalar_select %p445, %s444, 31
        %s447 = smul.addr %s446, 4
        %s448 = scalar_lea.vmem %s1, %s447
        %s449 = smul.u32 16, %s26
        %s450 = smul.u32 16, %s25
        %p451 = scmp.lt.s32.totalorder %s450, 31
        %s452 = scalar_select %p451, %s450, 31
        %s453 = smul.addr %s452, 8
        %s454 = scalar_lea.vmem %s4, %s453
        %s455 = smul.u32 16, %s25
        %s456 = smul.u32 16, %s25
        %p457 = scmp.lt.s32.totalorder %s456, 31
        %s458 = scalar_select %p457, %s456, 31
        %s459 = smul.addr %s458, 8
        %s460 = scalar_lea.vmem %s5, %s459
        %s461 = smul.u32 16, %s25
        %s462 = smul.u32 16, %s25
        %p464 = scmp.eq.s32.totalorder %s26, 0
        // Predicated region
        $region90: #{tpu_custom_call.1} parent=84 // pred_check
          %p465 = pneg %p464
        $region91: #{tpu_custom_call.1} parent=84 // pred_check_branch
          %467 = sbr.rel (%p465) target = $region93
        $region92: #{tpu_custom_call.1} parent=84 // pred_region
          %468 = vst [vmem:[#allocation2] sm:$0xff] 0.0
          %469 = vst [vmem:[#allocation2 + $0x8] sm:$0xff] 0.0
          %470 = vst [vmem:[#allocation2 + $0x10] sm:$0xff] 0.0
          %471 = vst [vmem:[#allocation2 + $0x18] sm:$0xff] 0.0
          %472 = vst [vmem:[#allocation2 + $0x20] sm:$0xff] 0.0
          %473 = vst [vmem:[#allocation2 + $0x28] sm:$0xff] 0.0
          %474 = vst [vmem:[#allocation2 + $0x30] sm:$0xff] 0.0
          %475 = vst [vmem:[#allocation2 + $0x38] sm:$0xff] 0.0
          %476 = vst [vmem:[#allocation2 + $0x40] sm:$0xff] 0.0
          %477 = vst [vmem:[#allocation2 + $0x48] sm:$0xff] 0.0
          %478 = vst [vmem:[#allocation2 + $0x50] sm:$0xff] 0.0
          %479 = vst [vmem:[#allocation2 + $0x58] sm:$0xff] 0.0
          %480 = vst [vmem:[#allocation2 + $0x60] sm:$0xff] 0.0
          %481 = vst [vmem:[#allocation2 + $0x68] sm:$0xff] 0.0
          %482 = vst [vmem:[#allocation2 + $0x70] sm:$0xff] 0.0
          %483 = vst [vmem:[#allocation2 + $0x78] sm:$0xff] 0.0
        $region93: #{tpu_custom_call.1} parent=84 // pred_fallthru
          _
        %v484 = vld [vmem:[#allocation2] sm:$0xff]
        %v485 = vld [vmem:[#allocation2 + $0x8] sm:$0xff]
        %v486 = vld [vmem:[#allocation2 + $0x10] sm:$0xff]
        %v487 = vld [vmem:[#allocation2 + $0x18] sm:$0xff]
        %v488 = vld [vmem:[#allocation2 + $0x20] sm:$0xff]
        %v489 = vld [vmem:[#allocation2 + $0x28] sm:$0xff]
        %v490 = vld [vmem:[#allocation2 + $0x30] sm:$0xff]
        %v491 = vld [vmem:[#allocation2 + $0x38] sm:$0xff]
        %v492 = vld [vmem:[#allocation2 + $0x40] sm:$0xff]
        %v493 = vld [vmem:[#allocation2 + $0x48] sm:$0xff]
        %v494 = vld [vmem:[#allocation2 + $0x50] sm:$0xff]
        %v495 = vld [vmem:[#allocation2 + $0x58] sm:$0xff]
        %v496 = vld [vmem:[#allocation2 + $0x60] sm:$0xff]
        %v497 = vld [vmem:[#allocation2 + $0x68] sm:$0xff]
        %v498 = vld [vmem:[#allocation2 + $0x70] sm:$0xff]
        %v499 = vld [vmem:[#allocation2 + $0x78] sm:$0xff]
        %v500 = vld [vmem:[%s399] sm:$0xf]
        %v501 = vld [vmem:[%s399 + $0x4] sm:$0xf]
        %v502 = vld [vmem:[%s399 + $0x8] sm:$0xf]
        %v503 = vld [vmem:[%s399 + $0xc] sm:$0xf]
        %v504 = vld [vmem:[%s399 + $0x10] sm:$0xf]
        %v505 = vld [vmem:[%s399 + $0x14] sm:$0xf]
        %v506 = vld [vmem:[%s399 + $0x18] sm:$0xf]
        %v507 = vld [vmem:[%s399 + $0x1c] sm:$0xf]
        %v508 = vld [vmem:[%s399 + $0x20] sm:$0xf]
        %v509 = vld [vmem:[%s399 + $0x24] sm:$0xf]
        %v510 = vld [vmem:[%s399 + $0x28] sm:$0xf]
        %v511 = vld [vmem:[%s399 + $0x2c] sm:$0xf]
        %v512 = vld [vmem:[%s399 + $0x30] sm:$0xf]
        %v513 = vld [vmem:[%s399 + $0x34] sm:$0xf]
        %v514 = vld [vmem:[%s399 + $0x38] sm:$0xf]
        %v515 = vld [vmem:[%s399 + $0x3c] sm:$0xf]
        %v516 = vld [vmem:[%s448] sm:$0xf]
        %v517 = vld [vmem:[%s448 + $0x4] sm:$0xf]
        %v518 = vld [vmem:[%s448 + $0x8] sm:$0xf]
        %v519 = vld [vmem:[%s448 + $0xc] sm:$0xf]
        %v520 = vld [vmem:[%s448 + $0x10] sm:$0xf]
        %v521 = vld [vmem:[%s448 + $0x14] sm:$0xf]
        %v522 = vld [vmem:[%s448 + $0x18] sm:$0xf]
        %v523 = vld [vmem:[%s448 + $0x1c] sm:$0xf]
        %v524 = vld [vmem:[%s448 + $0x20] sm:$0xf]
        %v525 = vld [vmem:[%s448 + $0x24] sm:$0xf]
        %v526 = vld [vmem:[%s448 + $0x28] sm:$0xf]
        %v527 = vld [vmem:[%s448 + $0x2c] sm:$0xf]
        %v528 = vld [vmem:[%s448 + $0x30] sm:$0xf]
        %v529 = vld [vmem:[%s448 + $0x34] sm:$0xf]
        %v530 = vld [vmem:[%s448 + $0x38] sm:$0xf]
        %v531 = vld [vmem:[%s448 + $0x3c] sm:$0xf]
        %v548 = vunpack.c.l.b16 %v500
        %v549 = vunpack.c.l.b16 %v501
        %v550 = vunpack.c.l.b16 %v502
        %v551 = vunpack.c.l.b16 %v503
        %v552 = vunpack.c.l.b16 %v504
        %v553 = vunpack.c.l.b16 %v505
        %v554 = vunpack.c.l.b16 %v506
        %v555 = vunpack.c.l.b16 %v507
        %v556 = vunpack.c.l.b16 %v508
        %v557 = vunpack.c.l.b16 %v509
        %v558 = vunpack.c.l.b16 %v510
        %v559 = vunpack.c.l.b16 %v511
        %v560 = vunpack.c.l.b16 %v512
        %v561 = vunpack.c.l.b16 %v513
        %v562 = vunpack.c.l.b16 %v514
        %v563 = vunpack.c.l.b16 %v515
        %v564 = vpack.c.b16 %v549, %v548
        %v565 = vpack.c.b16 %v551, %v550
        %v566 = vpack.c.b16 %v553, %v552
        %v567 = vpack.c.b16 %v555, %v554
        %v568 = vpack.c.b16 %v557, %v556
        %v569 = vpack.c.b16 %v559, %v558
        %v570 = vpack.c.b16 %v561, %v560
        %v571 = vpack.c.b16 %v563, %v562
        %v596 = vunpack.c.l.b16 %v516
        %v597 = vunpack.c.l.b16 %v517
        %v598 = vunpack.c.l.b16 %v518
        %v599 = vunpack.c.l.b16 %v519
        %v600 = vunpack.c.l.b16 %v520
        %v601 = vunpack.c.l.b16 %v521
        %v602 = vunpack.c.l.b16 %v522
        %v603 = vunpack.c.l.b16 %v523
        %v604 = vunpack.c.l.b16 %v524
        %v605 = vunpack.c.l.b16 %v525
        %v606 = vunpack.c.l.b16 %v526
        %v607 = vunpack.c.l.b16 %v527
        %v608 = vunpack.c.l.b16 %v528
        %v609 = vunpack.c.l.b16 %v529
        %v610 = vunpack.c.l.b16 %v530
        %v611 = vunpack.c.l.b16 %v531
        %v612 = vpack.c.b16 %v597, %v596
        %v613 = vpack.c.b16 %v599, %v598
        %v614 = vpack.c.b16 %v601, %v600
        %v615 = vpack.c.b16 %v603, %v602
        %v616 = vpack.c.b16 %v605, %v604
        %v617 = vpack.c.b16 %v607, %v606
        %v618 = vpack.c.b16 %v609, %v608
        %v619 = vpack.c.b16 %v611, %v610
        %628 = vmatprep.subr.bf16.mxu0 0
        %629 = vmatpush1.bf16.msra.mxu0 %v612
        %630 = vmatprep.subr.bf16.mxu0 0
        %631 = vmatpush1.bf16.msra.mxu0 %v613
        %632 = vmatprep.subr.bf16.mxu0 0
        %633 = vmatpush1.bf16.msra.mxu0 %v614
        %634 = vmatprep.subr.bf16.mxu0 0
        %635 = vmatpush1.bf16.msra.mxu0 %v615
        %636 = vmatprep.subr.bf16.mxu0 0
        %637 = vmatpush1.bf16.msra.mxu0 %v616
        %638 = vmatprep.subr.bf16.mxu0 0
        %639 = vmatpush1.bf16.msra.mxu0 %v617
        %640 = vmatprep.subr.bf16.mxu0 0
        %641 = vmatpush1.bf16.msra.mxu0 %v618
        %642 = vmatprep.subr.bf16.mxu0 0
        %643 = vmatpush1.bf16.msra.mxu0 %v619
        %644 = vmatprep.subr.bf16.mxu0 0
        %645 = vmatpush1.bf16.msra.mxu0 0
        %646 = vmatprep.subr.bf16.mxu0 0
        %647 = vmatpush1.bf16.msra.mxu0 0
        %648 = vmatprep.subr.bf16.mxu0 0
        %649 = vmatpush1.bf16.msra.mxu0 0
        %650 = vmatprep.subr.bf16.mxu0 0
        %651 = vmatpush1.bf16.msra.mxu0 0
        %652 = vmatprep.subr.bf16.mxu0 0
        %653 = vmatpush1.bf16.msra.mxu0 0
        %654 = vmatprep.subr.bf16.mxu0 0
        %655 = vmatpush1.bf16.msra.mxu0 0
        %656 = vmatprep.subr.bf16.mxu0 0
        %657 = vmatpush1.bf16.msra.mxu0 0
        %658 = vmatprep.subr.bf16.mxu0 0
        %659 = vmatpush1.bf16.msra.mxu0 0
        %660 = vmatprep.mubr.bf16.mxu0 0
        %661 = vmatmul.mubr.bf16.gmra.mrb[0].mxu0 %v564
        %v662 = vpop.f32.mrb[0].mxu0
        %v663 = vadd.f32 0.0, %v662
        %v664 = vpop.f32.mrb[0].mxu0
        %v665 = vpop.f32.mrb[0].mxu0
        %v666 = vadd.f32 0.0, %v665
        %v667 = vpop.f32.mrb[0].mxu0
        %668 = vmatprep.mubr.bf16.mxu0 0
        %669 = vmatmul.mubr.bf16.gmra.mrb[0].mxu0 %v565
        %v670 = vpop.f32.mrb[0].mxu0
        %v671 = vadd.f32 0.0, %v670
        %v672 = vpop.f32.mrb[0].mxu0
        %v673 = vpop.f32.mrb[0].mxu0
        %v674 = vadd.f32 0.0, %v673
        %v675 = vpop.f32.mrb[0].mxu0
        %676 = vmatprep.mubr.bf16.mxu0 0
        %677 = vmatmul.mubr.bf16.gmra.mrb[0].mxu0 %v566
        %v678 = vpop.f32.mrb[0].mxu0
        %v679 = vadd.f32 0.0, %v678
        %v680 = vpop.f32.mrb[0].mxu0
        %v681 = vpop.f32.mrb[0].mxu0
        %v682 = vadd.f32 0.0, %v681
        %v683 = vpop.f32.mrb[0].mxu0
        %684 = vmatprep.mubr.bf16.mxu0 0
        %685 = vmatmul.mubr.bf16.gmra.mrb[0].mxu0 %v567
        %v686 = vpop.f32.mrb[0].mxu0
        %v687 = vadd.f32 0.0, %v686
        %v688 = vpop.f32.mrb[0].mxu0
        %v689 = vpop.f32.mrb[0].mxu0
        %v690 = vadd.f32 0.0, %v689
        %v691 = vpop.f32.mrb[0].mxu0
        %692 = vmatprep.mubr.bf16.mxu0 0
        %693 = vmatmul.mubr.bf16.gmra.mrb[0].mxu0 %v568
        %v694 = vpop.f32.mrb[0].mxu0
        %v695 = vadd.f32 0.0, %v694
        %v696 = vpop.f32.mrb[0].mxu0
        %v697 = vpop.f32.mrb[0].mxu0
        %v698 = vadd.f32 0.0, %v697
        %v699 = vpop.f32.mrb[0].mxu0
        %700 = vmatprep.mubr.bf16.mxu0 0
        %701 = vmatmul.mubr.bf16.gmra.mrb[0].mxu0 %v569
        %v702 = vpop.f32.mrb[0].mxu0
        %v703 = vadd.f32 0.0, %v702
        %v704 = vpop.f32.mrb[0].mxu0
        %v705 = vpop.f32.mrb[0].mxu0
        %v706 = vadd.f32 0.0, %v705
        %v707 = vpop.f32.mrb[0].mxu0
        %708 = vmatprep.mubr.bf16.mxu0 0
        %709 = vmatmul.mubr.bf16.gmra.mrb[0].mxu0 %v570
        %v710 = vpop.f32.mrb[0].mxu0
        %v711 = vadd.f32 0.0, %v710
        %v712 = vpop.f32.mrb[0].mxu0
        %v713 = vpop.f32.mrb[0].mxu0
        %v714 = vadd.f32 0.0, %v713
        %v715 = vpop.f32.mrb[0].mxu0
        %716 = vmatprep.mubr.bf16.mxu0 0
        %717 = vmatmul.mubr.bf16.gmra.mrb[0].mxu0 %v571
        %v718 = vpop.f32.mrb[0].mxu0
        %v719 = vadd.f32 0.0, %v718
        %v720 = vpop.f32.mrb[0].mxu0
        %v721 = vpop.f32.mrb[0].mxu0
        %v722 = vadd.f32 0.0, %v721
        %v723 = vpop.f32.mrb[0].mxu0
        %724 = vdwg.mxu0
        %v725 = vadd.f32 %v484, %v663
        %v726 = vadd.f32 %v485, %v666
        %v727 = vadd.f32 %v486, %v671
        %v728 = vadd.f32 %v487, %v674
        %v729 = vadd.f32 %v488, %v679
        %v730 = vadd.f32 %v489, %v682
        %v731 = vadd.f32 %v490, %v687
        %v732 = vadd.f32 %v491, %v690
        %v733 = vadd.f32 %v492, %v695
        %v734 = vadd.f32 %v493, %v698
        %v735 = vadd.f32 %v494, %v703
        %v736 = vadd.f32 %v495, %v706
        %v737 = vadd.f32 %v496, %v711
        %v738 = vadd.f32 %v497, %v714
        %v739 = vadd.f32 %v498, %v719
        %v740 = vadd.f32 %v499, %v722
        %741 = vst [vmem:[#allocation2] sm:$0xff] %v725
        %742 = vst [vmem:[#allocation2 + $0x8] sm:$0xff] %v726
        %743 = vst [vmem:[#allocation2 + $0x10] sm:$0xff] %v727
        %744 = vst [vmem:[#allocation2 + $0x18] sm:$0xff] %v728
        %745 = vst [vmem:[#allocation2 + $0x20] sm:$0xff] %v729
        %746 = vst [vmem:[#allocation2 + $0x28] sm:$0xff] %v730
        %747 = vst [vmem:[#allocation2 + $0x30] sm:$0xff] %v731
        %748 = vst [vmem:[#allocation2 + $0x38] sm:$0xff] %v732
        %749 = vst [vmem:[#allocation2 + $0x40] sm:$0xff] %v733
        %750 = vst [vmem:[#allocation2 + $0x48] sm:$0xff] %v734
        %751 = vst [vmem:[#allocation2 + $0x50] sm:$0xff] %v735
        %752 = vst [vmem:[#allocation2 + $0x58] sm:$0xff] %v736
        %753 = vst [vmem:[#allocation2 + $0x60] sm:$0xff] %v737
        %754 = vst [vmem:[#allocation2 + $0x68] sm:$0xff] %v738
        %755 = vst [vmem:[#allocation2 + $0x70] sm:$0xff] %v739
        %756 = vst [vmem:[#allocation2 + $0x78] sm:$0xff] %v740
        %p757 = scmp.eq.s32.totalorder %s26, 1
        // Predicated region
        $region94: #{tpu_custom_call.1} parent=84 // pred_check
          %p758 = pneg %p757
        $region95: #{tpu_custom_call.1} parent=84 // pred_check_branch
          %760 = sbr.rel (%p758) target = $region97
        $region96: #{tpu_custom_call.1} parent=84 // pred_region
          %v761 = vld [vmem:[#allocation2] sm:$0xff]
          %v762 = vld [vmem:[#allocation2 + $0x8] sm:$0xff]
          %v763 = vld [vmem:[#allocation2 + $0x10] sm:$0xff]
          %v764 = vld [vmem:[#allocation2 + $0x18] sm:$0xff]
          %v765 = vld [vmem:[#allocation2 + $0x20] sm:$0xff]
          %v766 = vld [vmem:[#allocation2 + $0x28] sm:$0xff]
          %v767 = vld [vmem:[#allocation2 + $0x30] sm:$0xff]
          %v768 = vld [vmem:[#allocation2 + $0x38] sm:$0xff]
          %v769 = vld [vmem:[#allocation2 + $0x40] sm:$0xff]
          %v770 = vld [vmem:[#allocation2 + $0x48] sm:$0xff]
          %v771 = vld [vmem:[#allocation2 + $0x50] sm:$0xff]
          %v772 = vld [vmem:[#allocation2 + $0x58] sm:$0xff]
          %v773 = vld [vmem:[#allocation2 + $0x60] sm:$0xff]
          %v774 = vld [vmem:[#allocation2 + $0x68] sm:$0xff]
          %v775 = vld [vmem:[#allocation2 + $0x70] sm:$0xff]
          %v776 = vld [vmem:[#allocation2 + $0x78] sm:$0xff]
          %v777 = vpack.c.bf16 %v762, %v761
          %v778 = vpack.c.bf16 %v764, %v763
          %v779 = vpack.c.bf16 %v766, %v765
          %v780 = vpack.c.bf16 %v768, %v767
          %v781 = vpack.c.bf16 %v770, %v769
          %v782 = vpack.c.bf16 %v772, %v771
          %v783 = vpack.c.bf16 %v774, %v773
          %v784 = vpack.c.bf16 %v776, %v775
          %v785 = vld [vmem:[%s2] sm:$0xf]
          %v786 = vld [vmem:[%s2 + $0x4] sm:$0xf]
          %v787 = vld [vmem:[%s2 + $0x8] sm:$0xf]
          %v788 = vld [vmem:[%s2 + $0xc] sm:$0xf]
          %v789 = vld [vmem:[%s2 + $0x10] sm:$0xf]
          %v790 = vld [vmem:[%s2 + $0x14] sm:$0xf]
          %v791 = vld [vmem:[%s2 + $0x18] sm:$0xf]
          %v792 = vld [vmem:[%s2 + $0x1c] sm:$0xf]
          %v793 = vld [vmem:[%s2 + $0x20] sm:$0xf]
          %v794 = vld [vmem:[%s2 + $0x24] sm:$0xf]
          %v795 = vld [vmem:[%s2 + $0x28] sm:$0xf]
          %v796 = vld [vmem:[%s2 + $0x2c] sm:$0xf]
          %v797 = vld [vmem:[%s2 + $0x30] sm:$0xf]
          %v798 = vld [vmem:[%s2 + $0x34] sm:$0xf]
          %v799 = vld [vmem:[%s2 + $0x38] sm:$0xf]
          %v800 = vld [vmem:[%s2 + $0x3c] sm:$0xf]
          %v817 = vunpack.c.l.b16 %v785
          %v818 = vunpack.c.l.b16 %v786
          %v819 = vunpack.c.l.b16 %v787
          %v820 = vunpack.c.l.b16 %v788
          %v821 = vunpack.c.l.b16 %v789
          %v822 = vunpack.c.l.b16 %v790
          %v823 = vunpack.c.l.b16 %v791
          %v824 = vunpack.c.l.b16 %v792
          %v825 = vunpack.c.l.b16 %v793
          %v826 = vunpack.c.l.b16 %v794
          %v827 = vunpack.c.l.b16 %v795
          %v828 = vunpack.c.l.b16 %v796
          %v829 = vunpack.c.l.b16 %v797
          %v830 = vunpack.c.l.b16 %v798
          %v831 = vunpack.c.l.b16 %v799
          %v832 = vunpack.c.l.b16 %v800
          %v833 = vpack.c.b16 %v818, %v817
          %v834 = vpack.c.b16 %v820, %v819
          %v835 = vpack.c.b16 %v822, %v821
          %v836 = vpack.c.b16 %v824, %v823
          %v837 = vpack.c.b16 %v826, %v825
          %v838 = vpack.c.b16 %v828, %v827
          %v839 = vpack.c.b16 %v830, %v829
          %v840 = vpack.c.b16 %v832, %v831
          %849 = vmatprep.subr.bf16.mxu0 0
          %850 = vmatpush1.bf16.msra.mxu0 %v833
          %851 = vmatprep.subr.bf16.mxu0 0
          %852 = vmatpush1.bf16.msra.mxu0 %v834
          %853 = vmatprep.subr.bf16.mxu0 0
          %854 = vmatpush1.bf16.msra.mxu0 %v835
          %855 = vmatprep.subr.bf16.mxu0 0
          %856 = vmatpush1.bf16.msra.mxu0 %v836
          %857 = vmatprep.subr.bf16.mxu0 0
          %858 = vmatpush1.bf16.msra.mxu0 %v837
          %859 = vmatprep.subr.bf16.mxu0 0
          %860 = vmatpush1.bf16.msra.mxu0 %v838
          %861 = vmatprep.subr.bf16.mxu0 0
          %862 = vmatpush1.bf16.msra.mxu0 %v839
          %863 = vmatprep.subr.bf16.mxu0 0
          %864 = vmatpush1.bf16.msra.mxu0 %v840
          %865 = vmatprep.subr.bf16.mxu0 0
          %866 = vmatpush1.bf16.msra.mxu0 0
          %867 = vmatprep.subr.bf16.mxu0 0
          %868 = vmatpush1.bf16.msra.mxu0 0
          %869 = vmatprep.subr.bf16.mxu0 0
          %870 = vmatpush1.bf16.msra.mxu0 0
          %871 = vmatprep.subr.bf16.mxu0 0
          %872 = vmatpush1.bf16.msra.mxu0 0
          %873 = vmatprep.subr.bf16.mxu0 0
          %874 = vmatpush1.bf16.msra.mxu0 0
          %875 = vmatprep.subr.bf16.mxu0 0
          %876 = vmatpush1.bf16.msra.mxu0 0
          %877 = vmatprep.subr.bf16.mxu0 0
          %878 = vmatpush1.bf16.msra.mxu0 0
          %879 = vmatprep.subr.bf16.mxu0 0
          %880 = vmatpush1.bf16.msra.mxu0 0
          %881 = vmatprep.mubr.bf16.mxu0 0
          %882 = vmatmul.mubr.bf16.gmra.mrb[0].mxu0 %v777
          %v883 = vpop.f32.mrb[0].mxu0
          %v884 = vadd.f32 0.0, %v883
          %v885 = vpop.f32.mrb[0].mxu0
          %v886 = vpop.f32.mrb[0].mxu0
          %v887 = vadd.f32 0.0, %v886
          %v888 = vpop.f32.mrb[0].mxu0
          %889 = vmatprep.mubr.bf16.mxu0 0
          %890 = vmatmul.mubr.bf16.gmra.mrb[0].mxu0 %v778
          %v891 = vpop.f32.mrb[0].mxu0
          %v892 = vadd.f32 0.0, %v891
          %v893 = vpop.f32.mrb[0].mxu0
          %v894 = vpop.f32.mrb[0].mxu0
          %v895 = vadd.f32 0.0, %v894
          %v896 = vpop.f32.mrb[0].mxu0
          %897 = vmatprep.mubr.bf16.mxu0 0
          %898 = vmatmul.mubr.bf16.gmra.mrb[0].mxu0 %v779
          %v899 = vpop.f32.mrb[0].mxu0
          %v900 = vadd.f32 0.0, %v899
          %v901 = vpop.f32.mrb[0].mxu0
          %v902 = vpop.f32.mrb[0].mxu0
          %v903 = vadd.f32 0.0, %v902
          %v904 = vpop.f32.mrb[0].mxu0
          %905 = vmatprep.mubr.bf16.mxu0 0
          %906 = vmatmul.mubr.bf16.gmra.mrb[0].mxu0 %v780
          %v907 = vpop.f32.mrb[0].mxu0
          %v908 = vadd.f32 0.0, %v907
          %v909 = vpop.f32.mrb[0].mxu0
          %v910 = vpop.f32.mrb[0].mxu0
          %v911 = vadd.f32 0.0, %v910
          %v912 = vpop.f32.mrb[0].mxu0
          %913 = vmatprep.mubr.bf16.mxu0 0
          %914 = vmatmul.mubr.bf16.gmra.mrb[0].mxu0 %v781
          %v915 = vpop.f32.mrb[0].mxu0
          %v916 = vadd.f32 0.0, %v915
          %v917 = vpop.f32.mrb[0].mxu0
          %v918 = vpop.f32.mrb[0].mxu0
          %v919 = vadd.f32 0.0, %v918
          %v920 = vpop.f32.mrb[0].mxu0
          %921 = vmatprep.mubr.bf16.mxu0 0
          %922 = vmatmul.mubr.bf16.gmra.mrb[0].mxu0 %v782
          %v923 = vpop.f32.mrb[0].mxu0
          %v924 = vadd.f32 0.0, %v923
          %v925 = vpop.f32.mrb[0].mxu0
          %v926 = vpop.f32.mrb[0].mxu0
          %v927 = vadd.f32 0.0, %v926
          %v928 = vpop.f32.mrb[0].mxu0
          %929 = vmatprep.mubr.bf16.mxu0 0
          %930 = vmatmul.mubr.bf16.gmra.mrb[0].mxu0 %v783
          %v931 = vpop.f32.mrb[0].mxu0
          %v932 = vadd.f32 0.0, %v931
          %v933 = vpop.f32.mrb[0].mxu0
          %v934 = vpop.f32.mrb[0].mxu0
          %v935 = vadd.f32 0.0, %v934
          %v936 = vpop.f32.mrb[0].mxu0
          %937 = vmatprep.mubr.bf16.mxu0 0
          %938 = vmatmul.mubr.bf16.gmra.mrb[0].mxu0 %v784
          %v939 = vpop.f32.mrb[0].mxu0
          %v940 = vadd.f32 0.0, %v939
          %v941 = vpop.f32.mrb[0].mxu0
          %v942 = vpop.f32.mrb[0].mxu0
          %v943 = vadd.f32 0.0, %v942
          %v944 = vpop.f32.mrb[0].mxu0
          %945 = vdwg.mxu0
          %v946 = vld [vmem:[%s454] sm:$0xff]
          %v947 = vld [vmem:[%s454 + $0x8] sm:$0xff]
          %v948 = vld [vmem:[%s454 + $0x10] sm:$0xff]
          %v949 = vld [vmem:[%s454 + $0x18] sm:$0xff]
          %v950 = vld [vmem:[%s454 + $0x20] sm:$0xff]
          %v951 = vld [vmem:[%s454 + $0x28] sm:$0xff]
          %v952 = vld [vmem:[%s454 + $0x30] sm:$0xff]
          %v953 = vld [vmem:[%s454 + $0x38] sm:$0xff]
          %v954 = vld [vmem:[%s454 + $0x40] sm:$0xff]
          %v955 = vld [vmem:[%s454 + $0x48] sm:$0xff]
          %v956 = vld [vmem:[%s454 + $0x50] sm:$0xff]
          %v957 = vld [vmem:[%s454 + $0x58] sm:$0xff]
          %v958 = vld [vmem:[%s454 + $0x60] sm:$0xff]
          %v959 = vld [vmem:[%s454 + $0x68] sm:$0xff]
          %v960 = vld [vmem:[%s454 + $0x70] sm:$0xff]
          %v961 = vld [vmem:[%s454 + $0x78] sm:$0xff]
          %v962 = vld [vmem:[%s3] sm:$0x1]
          %964 = vset.pattern.permute.xlu0 0
          %965 = vperm.xlu0 %964, %v946
          %v966 = vpop.permute.xlu0 %965
          %969 = vset.pattern.permute.xlu0 0
          %970 = vperm.xlu0 %969, %v947
          %v971 = vpop.permute.xlu0 %970
          %974 = vset.pattern.permute.xlu0 0
          %975 = vperm.xlu0 %974, %v948
          %v976 = vpop.permute.xlu0 %975
          %979 = vset.pattern.permute.xlu0 0
          %980 = vperm.xlu0 %979, %v949
          %v981 = vpop.permute.xlu0 %980
          %984 = vset.pattern.permute.xlu0 0
          %985 = vperm.xlu0 %984, %v950
          %v986 = vpop.permute.xlu0 %985
          %989 = vset.pattern.permute.xlu0 0
          %990 = vperm.xlu0 %989, %v951
          %v991 = vpop.permute.xlu0 %990
          %994 = vset.pattern.permute.xlu0 0
          %995 = vperm.xlu0 %994, %v952
          %v996 = vpop.permute.xlu0 %995
          %999 = vset.pattern.permute.xlu0 0
          %1000 = vperm.xlu0 %999, %v953
          %v1001 = vpop.permute.xlu0 %1000
          %1004 = vset.pattern.permute.xlu0 0
          %1005 = vperm.xlu0 %1004, %v954
          %v1006 = vpop.permute.xlu0 %1005
          %1009 = vset.pattern.permute.xlu0 0
          %1010 = vperm.xlu0 %1009, %v955
          %v1011 = vpop.permute.xlu0 %1010
          %1014 = vset.pattern.permute.xlu0 0
          %1015 = vperm.xlu0 %1014, %v956
          %v1016 = vpop.permute.xlu0 %1015
          %1019 = vset.pattern.permute.xlu0 0
          %1020 = vperm.xlu0 %1019, %v957
          %v1021 = vpop.permute.xlu0 %1020
          %1024 = vset.pattern.permute.xlu0 0
          %1025 = vperm.xlu0 %1024, %v958
          %v1026 = vpop.permute.xlu0 %1025
          %1029 = vset.pattern.permute.xlu0 0
          %1030 = vperm.xlu0 %1029, %v959
          %v1031 = vpop.permute.xlu0 %1030
          %1034 = vset.pattern.permute.xlu0 0
          %1035 = vperm.xlu0 %1034, %v960
          %v1036 = vpop.permute.xlu0 %1035
          %1039 = vset.pattern.permute.xlu0 0
          %1040 = vperm.xlu0 %1039, %v961
          %v1041 = vpop.permute.xlu0 %1040
          %v1044 = vlaneseq
          %v1045 = vshrl.u32 %v1044, 7
          %v1046 = vsub.s32 0, %v1045
          %v1047 = vrot.slane %v962, %v1046
          %v1049 = vmul.f32 %v966, %v1047
          %v1050 = vmul.f32 %v971, %v1047
          %v1051 = vmul.f32 %v976, %v1047
          %v1052 = vmul.f32 %v981, %v1047
          %v1053 = vmul.f32 %v986, %v1047
          %v1054 = vmul.f32 %v991, %v1047
          %v1055 = vmul.f32 %v996, %v1047
          %v1056 = vmul.f32 %v1001, %v1047
          %v1057 = vmul.f32 %v1006, %v1047
          %v1058 = vmul.f32 %v1011, %v1047
          %v1059 = vmul.f32 %v1016, %v1047
          %v1060 = vmul.f32 %v1021, %v1047
          %v1061 = vmul.f32 %v1026, %v1047
          %v1062 = vmul.f32 %v1031, %v1047
          %v1063 = vmul.f32 %v1036, %v1047
          %v1064 = vmul.f32 %v1041, %v1047
          %v1065 = vsub.f32 %v884, %v1049
          %v1066 = vsub.f32 %v887, %v1050
          %v1067 = vsub.f32 %v892, %v1051
          %v1068 = vsub.f32 %v895, %v1052
          %v1069 = vsub.f32 %v900, %v1053
          %v1070 = vsub.f32 %v903, %v1054
          %v1071 = vsub.f32 %v908, %v1055
          %v1072 = vsub.f32 %v911, %v1056
          %v1073 = vsub.f32 %v916, %v1057
          %v1074 = vsub.f32 %v919, %v1058
          %v1075 = vsub.f32 %v924, %v1059
          %v1076 = vsub.f32 %v927, %v1060
          %v1077 = vsub.f32 %v932, %v1061
          %v1078 = vsub.f32 %v935, %v1062
          %v1079 = vsub.f32 %v940, %v1063
          %v1080 = vsub.f32 %v943, %v1064
          %v1081 = vld [vmem:[%s460] sm:$0xff]
          %v1082 = vld [vmem:[%s460 + $0x8] sm:$0xff]
          %v1083 = vld [vmem:[%s460 + $0x10] sm:$0xff]
          %v1084 = vld [vmem:[%s460 + $0x18] sm:$0xff]
          %v1085 = vld [vmem:[%s460 + $0x20] sm:$0xff]
          %v1086 = vld [vmem:[%s460 + $0x28] sm:$0xff]
          %v1087 = vld [vmem:[%s460 + $0x30] sm:$0xff]
          %v1088 = vld [vmem:[%s460 + $0x38] sm:$0xff]
          %v1089 = vld [vmem:[%s460 + $0x40] sm:$0xff]
          %v1090 = vld [vmem:[%s460 + $0x48] sm:$0xff]
          %v1091 = vld [vmem:[%s460 + $0x50] sm:$0xff]
          %v1092 = vld [vmem:[%s460 + $0x58] sm:$0xff]
          %v1093 = vld [vmem:[%s460 + $0x60] sm:$0xff]
          %v1094 = vld [vmem:[%s460 + $0x68] sm:$0xff]
          %v1095 = vld [vmem:[%s460 + $0x70] sm:$0xff]
          %v1096 = vld [vmem:[%s460 + $0x78] sm:$0xff]
          %1098 = vset.pattern.permute.xlu0 0
          %1099 = vperm.xlu0 %1098, %v1081
          %v1100 = vpop.permute.xlu0 %1099
          %1103 = vset.pattern.permute.xlu0 0
          %1104 = vperm.xlu0 %1103, %v1082
          %v1105 = vpop.permute.xlu0 %1104
          %1108 = vset.pattern.permute.xlu0 0
          %1109 = vperm.xlu0 %1108, %v1083
          %v1110 = vpop.permute.xlu0 %1109
          %1113 = vset.pattern.permute.xlu0 0
          %1114 = vperm.xlu0 %1113, %v1084
          %v1115 = vpop.permute.xlu0 %1114
          %1118 = vset.pattern.permute.xlu0 0
          %1119 = vperm.xlu0 %1118, %v1085
          %v1120 = vpop.permute.xlu0 %1119
          %1123 = vset.pattern.permute.xlu0 0
          %1124 = vperm.xlu0 %1123, %v1086
          %v1125 = vpop.permute.xlu0 %1124
          %1128 = vset.pattern.permute.xlu0 0
          %1129 = vperm.xlu0 %1128, %v1087
          %v1130 = vpop.permute.xlu0 %1129
          %1133 = vset.pattern.permute.xlu0 0
          %1134 = vperm.xlu0 %1133, %v1088
          %v1135 = vpop.permute.xlu0 %1134
          %1138 = vset.pattern.permute.xlu0 0
          %1139 = vperm.xlu0 %1138, %v1089
          %v1140 = vpop.permute.xlu0 %1139
          %1143 = vset.pattern.permute.xlu0 0
          %1144 = vperm.xlu0 %1143, %v1090
          %v1145 = vpop.permute.xlu0 %1144
          %1148 = vset.pattern.permute.xlu0 0
          %1149 = vperm.xlu0 %1148, %v1091
          %v1150 = vpop.permute.xlu0 %1149
          %1153 = vset.pattern.permute.xlu0 0
          %1154 = vperm.xlu0 %1153, %v1092
          %v1155 = vpop.permute.xlu0 %1154
          %1158 = vset.pattern.permute.xlu0 0
          %1159 = vperm.xlu0 %1158, %v1093
          %v1160 = vpop.permute.xlu0 %1159
          %1163 = vset.pattern.permute.xlu0 0
          %1164 = vperm.xlu0 %1163, %v1094
          %v1165 = vpop.permute.xlu0 %1164
          %1168 = vset.pattern.permute.xlu0 0
          %1169 = vperm.xlu0 %1168, %v1095
          %v1170 = vpop.permute.xlu0 %1169
          %1173 = vset.pattern.permute.xlu0 0
          %1174 = vperm.xlu0 %1173, %v1096
          %v1175 = vpop.permute.xlu0 %1174
          %v1177 = vmul.f32 %v1065, %v1100
          %v1178 = vmul.f32 %v1066, %v1105
          %v1179 = vmul.f32 %v1067, %v1110
          %v1180 = vmul.f32 %v1068, %v1115
          %v1181 = vmul.f32 %v1069, %v1120
          %v1182 = vmul.f32 %v1070, %v1125
          %v1183 = vmul.f32 %v1071, %v1130
          %v1184 = vmul.f32 %v1072, %v1135
          %v1185 = vmul.f32 %v1073, %v1140
          %v1186 = vmul.f32 %v1074, %v1145
          %v1187 = vmul.f32 %v1075, %v1150
          %v1188 = vmul.f32 %v1076, %v1155
          %v1189 = vmul.f32 %v1077, %v1160
          %v1190 = vmul.f32 %v1078, %v1165
          %v1191 = vmul.f32 %v1079, %v1170
          %v1192 = vmul.f32 %v1080, %v1175
          %v1193 = vld [vmem:[%s6] sm:$0x1]
          %v1195 = vlaneseq
          %v1196 = vshrl.u32 %v1195, 7
          %v1197 = vsub.s32 0, %v1196
          %v1198 = vrot.slane %v1193, %v1197
          %v1200 = vadd.f32 %v1177, %v1198
          %v1201 = vadd.f32 %v1178, %v1198
          %v1202 = vadd.f32 %v1179, %v1198
          %v1203 = vadd.f32 %v1180, %v1198
          %v1204 = vadd.f32 %v1181, %v1198
          %v1205 = vadd.f32 %v1182, %v1198
          %v1206 = vadd.f32 %v1183, %v1198
          %v1207 = vadd.f32 %v1184, %v1198
          %v1208 = vadd.f32 %v1185, %v1198
          %v1209 = vadd.f32 %v1186, %v1198
          %v1210 = vadd.f32 %v1187, %v1198
          %v1211 = vadd.f32 %v1188, %v1198
          %v1212 = vadd.f32 %v1189, %v1198
          %v1213 = vadd.f32 %v1190, %v1198
          %v1214 = vadd.f32 %v1191, %v1198
          %v1215 = vadd.f32 %v1192, %v1198
          %1216 = vst [vmem:[%s442] sm:$0xff] %v1200
          %1217 = vst [vmem:[%s442 + $0x8] sm:$0xff] %v1201
          %1218 = vst [vmem:[%s442 + $0x10] sm:$0xff] %v1202
          %1219 = vst [vmem:[%s442 + $0x18] sm:$0xff] %v1203
          %1220 = vst [vmem:[%s442 + $0x20] sm:$0xff] %v1204
          %1221 = vst [vmem:[%s442 + $0x28] sm:$0xff] %v1205
          %1222 = vst [vmem:[%s442 + $0x30] sm:$0xff] %v1206
          %1223 = vst [vmem:[%s442 + $0x38] sm:$0xff] %v1207
          %1224 = vst [vmem:[%s442 + $0x40] sm:$0xff] %v1208
          %1225 = vst [vmem:[%s442 + $0x48] sm:$0xff] %v1209
          %1226 = vst [vmem:[%s442 + $0x50] sm:$0xff] %v1210
          %1227 = vst [vmem:[%s442 + $0x58] sm:$0xff] %v1211
          %1228 = vst [vmem:[%s442 + $0x60] sm:$0xff] %v1212
          %1229 = vst [vmem:[%s442 + $0x68] sm:$0xff] %v1213
          %1230 = vst [vmem:[%s442 + $0x70] sm:$0xff] %v1214
          %1231 = vst [vmem:[%s442 + $0x78] sm:$0xff] %v1215
        $region97: #{tpu_custom_call.1} parent=84 // pred_fallthru
          _
        %s1232 = sand.u32 %s210, 1
        %s1233 = scalar_lea.sflag [#allocation5], %s1232
        %s1234 = sand.u32 %s210, 1
        %s1235 = smul.addr %s1234, 128
        %s1236 = scalar_lea.vmem [#allocation4], %s1235
        // Predicated region
        $region98: #{tpu_custom_call.1} parent=84 // pred_check
          %p1237 = pneg %p220
        $region99: #{tpu_custom_call.1} parent=84 // pred_check_branch
          %1239 = sbr.rel (%p1237) target = $region101
        $region100: #{tpu_custom_call.1} parent=84 // pred_region
          %s1240 = smul.u32 16, %s25
          %s1242 = ssub.s32 2048, 2048
          %1243 = vsyncadd %s1233, %s1242
          %s1244 = smul.addr %s1240, 128
          %s1245 = scalar_lea.hbm %s7, %s1244
          %s1246 = sshll.u32 %s1236, 4
          %s1247 = int_to_ptr.vmem [resolvable:$true] %s1246
          %1252 = dma.vmem_to_hbm [thread:$0]  %s1247, 2048, %s1245, %s1233, 128, 128, 8
        $region101: #{tpu_custom_call.1} parent=84 // pred_fallthru
          _
      $region85: #{tpu_custom_call.1} parent=5 // pred_fallthru
        _
      %p1253 = scmp.le.s32.totalorder 2, %s16
      // Predicated region
      $region102: #{tpu_custom_call.1} parent=5 // pred_check
        %p1254 = pneg %p1253
      $region103: #{tpu_custom_call.1} parent=5 // pred_check_branch
        %1256 = sbr.rel (%p1254) target = $region105
      $region104: #{tpu_custom_call.1} parent=5 // pred_region
        %s1257 = ssub.s32 %s16, 2
        // Predicated region
        $region106: #{tpu_custom_call.1} parent=104 // pred_check
          %p1258 = pneg %p226
        $region107: #{tpu_custom_call.1} parent=104 // pred_check_branch
          %1260 = sbr.rel (%p1258) target = $region109
        $region108: #{tpu_custom_call.1} parent=104 // pred_region
          %s1261 = sand.u32 %s211, 1
          %s1262 = scalar_lea.sflag [#allocation5], %s1261
          %s1263 = sand.u32 %s211, 1
          %s1264 = smul.addr %s1263, 128
          %s1265 = scalar_lea.vmem [#allocation4], %s1264
          %1266 = dma.done %s1262, 2048
        $region109: #{tpu_custom_call.1} parent=104 // pred_fallthru
          _
      $region105: #{tpu_custom_call.1} parent=5 // pred_fallthru
        _
    $region6: #{tpu_custom_call.1} parent=1 // loop_footer
      %s20 = sadd.s32 1, %s16
    $region7: #{tpu_custom_call.1} parent=1 // loop_footer_branch
      %15 = sbr.rel target = $region3
    $region8: #{tpu_custom_call.1} parent=1 // loop_exit
      _
    %1267 = vsyncpa [#allocation5], 1
    %s1268 = scalar_lea.sflag [#allocation5], 1
    %1269 = vsyncpa %s1268, 1

</llo_original>
